<compile_context>
chip_gen: v6e
topology: v6e:2x2x1
jax: 0.10.0
libtpu: 0.0.40
codegen_flags: <defaults>
</compile_context>

<pallas_src>
import math

import jax
import jax.numpy as jnp
from jax.experimental import pallas as pl
from jax.experimental.pallas import tpu as pltpu

D_MODEL = 32
NUM_HEADS = 4
D_HEAD = D_MODEL // NUM_HEADS
SQRT_DIM = math.sqrt(D_MODEL)


def _row_tile(n, max_tile=512):
    """Largest row tile: whole array when small, else a big divisor of n."""
    if n <= max_tile:
        return n
    for cand in (512, 256, 128, 64, 32, 16, 8):
        if n % cand == 0:
            return cand
    return n


# ---------------------------------------------------------------------------
# Kernel 1: fused q/k/v/pos projections — four dots per grid step, four
# separate activation inputs (no HBM stack), four lane-dense (rows, D) outputs.
# ---------------------------------------------------------------------------
def _proj_kernel(q_ref, k_ref, v_ref, pe_ref, w_ref, b_ref,
                 oq_ref, ok_ref, ov_ref, op_ref):
    x_refs = (q_ref, k_ref, v_ref, pe_ref)
    o_refs = (oq_ref, ok_ref, ov_ref, op_ref)
    for i in range(4):                                   # static, 4 iterations
        o_refs[i][...] = (
            jnp.dot(x_refs[i][...], w_ref[i], preferred_element_type=jnp.float32)
            + b_ref[i]
        )


# ---------------------------------------------------------------------------
# Kernel 2: plain linear (output projection), row-tiled grid.
# ---------------------------------------------------------------------------
def _linear_kernel(x_ref, w_ref, b_ref, o_ref):
    o_ref[...] = (
        jnp.dot(x_ref[...], w_ref[...], preferred_element_type=jnp.float32)
        + b_ref[...]
    )


def linear(x, w, b):
    n, d_in = x.shape
    d_out = w.shape[1]
    rt = _row_tile(n)
    return pl.pallas_call(
        _linear_kernel,
        out_shape=jax.ShapeDtypeStruct((n, d_out), jnp.float32),
        grid=(n // rt,),
        in_specs=[
            pl.BlockSpec((rt, d_in), lambda i: (i, 0)),
            pl.BlockSpec((d_in, d_out), lambda i: (0, 0)),
            pl.BlockSpec((1, d_out), lambda i: (0, 0)),
        ],
        out_specs=pl.BlockSpec((rt, d_out), lambda i: (i, 0)),
        compiler_params=pltpu.CompilerParams(dimension_semantics=("parallel",)),
    )(x, w, b)


# ---------------------------------------------------------------------------
# Kernel 3: attention for one (batch, head) grid step.
#   content & positional scores, vectorized Transformer-XL relative shift,
#   additive mask, f32 softmax, attn @ V.
# ---------------------------------------------------------------------------
def _attn_kernel(q_ref, k_ref, v_ref, p_ref, u_ref, vb_ref, maskf_ref, o_ref):
    T, Dh = q_ref.shape[2], q_ref.shape[3]
    scale = jnp.float32(1.0 / SQRT_DIM)

    q = q_ref[0, 0]                                    # (T, Dh)
    k = k_ref[0, 0]
    v = v_ref[0, 0]
    p = p_ref[0, 0]
    # hoisted bias adds + folded 1/sqrt(d_model)
    qu = (q + u_ref[0]) * scale                        # (T, Dh)
    qv = (q + vb_ref[0]) * scale

    dn = (((1,), (1,)), ((), ()))                      # contract Dh of both sides
    cs = jax.lax.dot_general(qu, k, dn, preferred_element_type=jnp.float32)  # (T,T)
    ps = jax.lax.dot_general(qv, p, dn, preferred_element_type=jnp.float32)  # (T,T)

    # --- vectorized relative shift (exact pad+reshape semantics) -------------
    # target[t, s] = ps[t, s+T-1-t]   for s <= t
    #                0 (ps term)      for s == t+1
    #                ps[t+1, s-t-2]   for s >= t+2
    # A[t, s] = ps[t, (s-t-1) mod T] built via a barrel shifter of static lane
    # rolls (concat of slices) gated per-row; B[t] = A[t+1] via a sublane roll.
    row = jax.lax.broadcasted_iota(jnp.int32, (T, 1), 0)
    col = jax.lax.broadcasted_iota(jnp.int32, (T, T), 1)
    shift = row + 1                                    # per-row right-roll amount
    a = ps
    step = 1
    while step < T:                                    # O(log T) whole-tile ops
        rolled = jnp.concatenate([a[:, T - step:], a[:, :T - step]], axis=1)
        a = jnp.where((shift & step) != 0, rolled, a)
        step *= 2
    b = jnp.concatenate([a[1:, :], a[:1, :]], axis=0)  # b[t] = a[t+1] (wrap unused)
    ps_shift = jnp.where(col <= row, a,
                         jnp.where(col == row + 1, jnp.float32(0.0), b))

    # --- masked softmax (f32) + context --------------------------------------
    score = cs + ps_shift + maskf_ref[0]               # additive mask, broadcast rows
    mx = jnp.max(score, axis=-1, keepdims=True)
    e = jnp.exp(score - mx)
    denom = jnp.sum(e, axis=-1, keepdims=True)
    attn = e * pl.reciprocal(denom, approx=True)       # EUP slot, VALU stays free
    o_ref[0, 0] = jnp.dot(attn, v, preferred_element_type=jnp.float32)  # (T, Dh)


# ---------------------------------------------------------------------------
# Full forward pass
# ---------------------------------------------------------------------------
def relative_mha_forward(params, query, key, value, pos_embedding, mask=None):
    B, T, D = query.shape
    H, Dh = NUM_HEADS, D_HEAD
    BT = B * T
    f32 = jnp.float32

    # ---- Stage 1: fused projections (one call, four dots per step) ----------
    w4 = jnp.stack([params["wq"], params["wk"], params["wv"], params["wp"]])
    b4 = jnp.stack([params["bq"], params["bk"], params["bv"],
                    jnp.zeros((1, D), f32)])            # pos_proj has no bias
    rt = _row_tile(BT)
    act_spec = pl.BlockSpec((rt, D), lambda r: (r, 0))
    q2, k2, v2, p2 = pl.pallas_call(
        _proj_kernel,
        out_shape=tuple(jax.ShapeDtypeStruct((BT, D), f32) for _ in range(4)),
        grid=(BT // rt,),
        in_specs=[act_spec, act_spec, act_spec, act_spec,
                  pl.BlockSpec((4, D, D), lambda r: (0, 0, 0)),
                  pl.BlockSpec((4, 1, D), lambda r: (0, 0, 0))],
        out_specs=tuple(pl.BlockSpec((rt, D), lambda r: (r, 0)) for _ in range(4)),
        compiler_params=pltpu.CompilerParams(dimension_semantics=("parallel",)),
    )(query.reshape(BT, D), key.reshape(BT, D), value.reshape(BT, D),
      pos_embedding.reshape(BT, D), w4, b4)

    # ---- wrapper-side layout plumbing: head-major views for the attention ---
    def split_heads(x):                                 # (BT, D) -> (B, H, T, Dh)
        return x.reshape(B, T, H, Dh).transpose(0, 2, 1, 3)
    qh, kh, vh, ph = (split_heads(x) for x in (q2, k2, v2, p2))
    u3 = params["u_bias"].reshape(H, 1, Dh)
    vb3 = params["v_bias"].reshape(H, 1, Dh)

    # ---- additive float mask, precomputed once (hoisted out of the kernel) --
    if mask is None:
        maskf = jnp.zeros((B, 1, T), f32)
    else:
        m = mask if mask.ndim == 3 else mask[:, None, :]
        maskf = jnp.where(m, f32(-1e9), f32(0.0))
    Tm = maskf.shape[1]

    # ---- Stage 2: attention, grid over (batch, head), both parallel ---------
    qkv_spec = pl.BlockSpec((1, 1, T, Dh), lambda b, h: (b, h, 0, 0))
    bias_spec = pl.BlockSpec((1, 1, Dh), lambda b, h: (h, 0, 0))
    ctx = pl.pallas_call(
        _attn_kernel,
        out_shape=jax.ShapeDtypeStruct((B, H, T, Dh), f32),
        grid=(B, H),
        in_specs=[qkv_spec, qkv_spec, qkv_spec, qkv_spec,
                  bias_spec, bias_spec,
                  pl.BlockSpec((1, Tm, T), lambda b, h: (b, 0, 0))],
        out_specs=pl.BlockSpec((1, 1, T, Dh), lambda b, h: (b, h, 0, 0)),
        compiler_params=pltpu.CompilerParams(
            dimension_semantics=("parallel", "parallel")),
    )(qh, kh, vh, ph, u3, vb3, maskf)

    # ---- head merge (wrapper-side) + output projection -----------------------
    ctx = ctx.transpose(0, 2, 1, 3).reshape(BT, D)
    out = linear(ctx, params["wo"], params["bo"])
    return out.reshape(B, T, D)


# ---------------------------------------------------------------------------
# Pure-JAX reference (mirrors the PyTorch forward exactly) for validation.
# ---------------------------------------------------------------------------
def reference_forward(params, query, key, value, pos_embedding, mask=None):
    B, T, D = query.shape
    H, Dh = NUM_HEADS, D_HEAD
    q = (query @ params["wq"] + params["bq"]).reshape(B, T, H, Dh)
    k = (key @ params["wk"] + params["bk"]).reshape(B, T, H, Dh).transpose(0, 2, 1, 3)
    v = (value @ params["wv"] + params["bv"]).reshape(B, T, H, Dh).transpose(0, 2, 1, 3)
    p = (pos_embedding @ params["wp"]).reshape(B, T, H, Dh).transpose(0, 2, 1, 3)

    content = jnp.einsum("bthd,bhsd->bhts", q + params["u_bias"], k)
    pos = jnp.einsum("bthd,bhsd->bhts", q + params["v_bias"], p)
    zeros = jnp.zeros((B, H, T, 1), pos.dtype)
    padded = jnp.concatenate([zeros, pos], axis=-1).reshape(B, H, T + 1, T)
    pos = padded[:, :, 1:, :].reshape(B, H, T, T)

    score = (content + pos) / SQRT_DIM
    if mask is not None:
        score = jnp.where(mask[:, None], -1e9, score)
    attn = jax.nn.softmax(score, axis=-1)
    ctx = jnp.einsum("bhts,bhsd->bthd", attn, v).reshape(B, T, D)
    return ctx @ params["wo"] + params["bo"]


if __name__ == "__main__":
    B, T = 2, 8
    D, H, Dh = D_MODEL, NUM_HEADS, D_HEAD

    root = jax.random.PRNGKey(0)
    keys = jax.random.split(root, 16)

    def init(k, shape, scale=0.05):
        return (jax.random.normal(k, shape, jnp.float32) * scale).astype(jnp.float32)

    params = {
        "wq": init(keys[0], (D, D)), "bq": init(keys[1], (1, D)),
        "wk": init(keys[2], (D, D)), "bk": init(keys[3], (1, D)),
        "wv": init(keys[4], (D, D)), "bv": init(keys[5], (1, D)),
        "wp": init(keys[6], (D, D)),                     # pos_proj has no bias
        "u_bias": init(keys[7], (H, Dh)),
        "v_bias": init(keys[8], (H, Dh)),
        "wo": init(keys[9], (D, D)), "bo": init(keys[10], (1, D)),
    }

    query = jax.random.normal(keys[11], (B, T, D), jnp.float32)
    key_t = jax.random.normal(keys[12], (B, T, D), jnp.float32)
    value = jax.random.normal(keys[13], (B, T, D), jnp.float32)
    pos_embedding = jax.random.normal(keys[14], (B, T, D), jnp.float32)

    # padding mask, shape (B, 1, T): batch 0 masks last 2 positions, batch 1 none
    lengths = jnp.array([6, 8])
    mask = jnp.arange(T)[None, None, :] >= lengths[:, None, None]   # bool (B,1,T)

    out = relative_mha_forward(params, query, key_t, value, pos_embedding, mask)
    out = jax.block_until_ready(out)

    ref = reference_forward(params, query, key_t, value, pos_embedding, mask)
    assert out.shape == (B, T, D)
    # tolerance slightly relaxed vs pure-f32 because the softmax denominator
    # uses the EUP approximate reciprocal (~2^-12 relative error).
    assert jnp.allclose(out, ref, rtol=2e-3, atol=2e-3), "mismatch vs reference"

    print("KERNEL_OK")
</pallas_src>

<mosaic_0001>
module attributes {stable_mosaic.version = 11 : i64} {
  func.func @_proj_kernel(%arg0: i32, %arg1: memref<16x32xf32, #tpu.memory_space<vmem>>, %arg2: memref<16x32xf32, #tpu.memory_space<vmem>>, %arg3: memref<16x32xf32, #tpu.memory_space<vmem>>, %arg4: memref<16x32xf32, #tpu.memory_space<vmem>>, %arg5: memref<4x32x32xf32, #tpu.memory_space<vmem>>, %arg6: memref<4x1x32xf32, #tpu.memory_space<vmem>>, %arg7: memref<16x32xf32, #tpu.memory_space<vmem>>, %arg8: memref<16x32xf32, #tpu.memory_space<vmem>>, %arg9: memref<16x32xf32, #tpu.memory_space<vmem>>, %arg10: memref<16x32xf32, #tpu.memory_space<vmem>>) attributes {dimension_semantics = [#tpu.dimension_semantics<parallel>], iteration_bounds = array<i64: 1>, scalar_prefetch = 0 : i64, scratch_operands = 0 : i64, tpu.core_type = #tpu.core_type<tc>, window_params = [{transform_indices = @transform_0, window_bounds = array<i64: 16, 32>}, {transform_indices = @transform_1, window_bounds = array<i64: 16, 32>}, {transform_indices = @transform_2, window_bounds = array<i64: 16, 32>}, {transform_indices = @transform_3, window_bounds = array<i64: 16, 32>}, {pipeline_mode = #tpu.pipeline_mode<synchronous>, transform_indices = @transform_4, window_bounds = array<i64: 4, 32, 32>}, {pipeline_mode = #tpu.pipeline_mode<synchronous>, transform_indices = @transform_5, window_bounds = array<i64: 4, 1, 32>}, {transform_indices = @transform_6, window_bounds = array<i64: 16, 32>}, {transform_indices = @transform_7, window_bounds = array<i64: 16, 32>}, {transform_indices = @transform_8, window_bounds = array<i64: 16, 32>}, {transform_indices = @transform_9, window_bounds = array<i64: 16, 32>}]} {
    %c0 = arith.constant 0 : index
    %c0_0 = arith.constant 0 : index
    %0 = vector.load %arg1[%c0, %c0_0] : memref<16x32xf32, #tpu.memory_space<vmem>>, vector<16x32xf32>
    %c0_1 = arith.constant 0 : index
    %c0_2 = arith.constant 0 : index
    %c0_3 = arith.constant 0 : index
    %1 = vector.load %arg5[%c0_1, %c0_2, %c0_3] : memref<4x32x32xf32, #tpu.memory_space<vmem>>, vector<1x32x32xf32>
    %2 = vector.shape_cast %1 : vector<1x32x32xf32> to vector<32x32xf32>
    %cst = arith.constant dense<0.000000e+00> : vector<16x32xf32>
    %3 = tpu.matmul %0, %2, %cst {dimension_numbers = #tpu.dot_dimension_numbers<[1], [0], [0], [1], [0, 0, 1, 1], [], []>} : vector<16x32xf32>, vector<32x32xf32>, vector<16x32xf32> -> vector<16x32xf32>
    %c0_4 = arith.constant 0 : index
    %c0_5 = arith.constant 0 : index
    %c0_6 = arith.constant 0 : index
    %4 = vector.load %arg6[%c0_4, %c0_5, %c0_6] : memref<4x1x32xf32, #tpu.memory_space<vmem>>, vector<1x1x32xf32>
    %5 = vector.shape_cast %4 : vector<1x1x32xf32> to vector<1x32xf32>
    %6 = vector.broadcast %5 : vector<1x32xf32> to vector<16x32xf32>
    %7 = arith.addf %3, %6 : vector<16x32xf32>
    %c0_7 = arith.constant 0 : index
    %c0_8 = arith.constant 0 : index
    %8 = vector.load %arg7[%c0_7, %c0_8] : memref<16x32xf32, #tpu.memory_space<vmem>>, vector<16x32xf32>
    tpu.vector_store %arg7[%c0_7, %c0_8], %7 {strides = array<i32>} : memref<16x32xf32, #tpu.memory_space<vmem>>, vector<16x32xf32>,
    %c0_9 = arith.constant 0 : index
    %c0_10 = arith.constant 0 : index
    %9 = vector.load %arg2[%c0_9, %c0_10] : memref<16x32xf32, #tpu.memory_space<vmem>>, vector<16x32xf32>
    %c1 = arith.constant 1 : index
    %c0_11 = arith.constant 0 : index
    %c0_12 = arith.constant 0 : index
    %10 = vector.load %arg5[%c1, %c0_11, %c0_12] : memref<4x32x32xf32, #tpu.memory_space<vmem>>, vector<1x32x32xf32>
    %11 = vector.shape_cast %10 : vector<1x32x32xf32> to vector<32x32xf32>
    %cst_13 = arith.constant dense<0.000000e+00> : vector<16x32xf32>
    %12 = tpu.matmul %9, %11, %cst_13 {dimension_numbers = #tpu.dot_dimension_numbers<[1], [0], [0], [1], [0, 0, 1, 1], [], []>} : vector<16x32xf32>, vector<32x32xf32>, vector<16x32xf32> -> vector<16x32xf32>
    %c1_14 = arith.constant 1 : index
    %c0_15 = arith.constant 0 : index
    %c0_16 = arith.constant 0 : index
    %13 = vector.load %arg6[%c1_14, %c0_15, %c0_16] : memref<4x1x32xf32, #tpu.memory_space<vmem>>, vector<1x1x32xf32>
    %14 = vector.shape_cast %13 : vector<1x1x32xf32> to vector<1x32xf32>
    %15 = vector.broadcast %14 : vector<1x32xf32> to vector<16x32xf32>
    %16 = arith.addf %12, %15 : vector<16x32xf32>
    %c0_17 = arith.constant 0 : index
    %c0_18 = arith.constant 0 : index
    %17 = vector.load %arg8[%c0_17, %c0_18] : memref<16x32xf32, #tpu.memory_space<vmem>>, vector<16x32xf32>
    tpu.vector_store %arg8[%c0_17, %c0_18], %16 {strides = array<i32>} : memref<16x32xf32, #tpu.memory_space<vmem>>, vector<16x32xf32>,
    %c0_19 = arith.constant 0 : index
    %c0_20 = arith.constant 0 : index
    %18 = vector.load %arg3[%c0_19, %c0_20] : memref<16x32xf32, #tpu.memory_space<vmem>>, vector<16x32xf32>
    %c2 = arith.constant 2 : index
    %c0_21 = arith.constant 0 : index
    %c0_22 = arith.constant 0 : index
    %19 = vector.load %arg5[%c2, %c0_21, %c0_22] : memref<4x32x32xf32, #tpu.memory_space<vmem>>, vector<1x32x32xf32>
    %20 = vector.shape_cast %19 : vector<1x32x32xf32> to vector<32x32xf32>
    %cst_23 = arith.constant dense<0.000000e+00> : vector<16x32xf32>
    %21 = tpu.matmul %18, %20, %cst_23 {dimension_numbers = #tpu.dot_dimension_numbers<[1], [0], [0], [1], [0, 0, 1, 1], [], []>} : vector<16x32xf32>, vector<32x32xf32>, vector<16x32xf32> -> vector<16x32xf32>
    %c2_24 = arith.constant 2 : index
    %c0_25 = arith.constant 0 : index
    %c0_26 = arith.constant 0 : index
    %22 = vector.load %arg6[%c2_24, %c0_25, %c0_26] : memref<4x1x32xf32, #tpu.memory_space<vmem>>, vector<1x1x32xf32>
    %23 = vector.shape_cast %22 : vector<1x1x32xf32> to vector<1x32xf32>
    %24 = vector.broadcast %23 : vector<1x32xf32> to vector<16x32xf32>
    %25 = arith.addf %21, %24 : vector<16x32xf32>
    %c0_27 = arith.constant 0 : index
    %c0_28 = arith.constant 0 : index
    %26 = vector.load %arg9[%c0_27, %c0_28] : memref<16x32xf32, #tpu.memory_space<vmem>>, vector<16x32xf32>
    tpu.vector_store %arg9[%c0_27, %c0_28], %25 {strides = array<i32>} : memref<16x32xf32, #tpu.memory_space<vmem>>, vector<16x32xf32>,
    %c0_29 = arith.constant 0 : index
    %c0_30 = arith.constant 0 : index
    %27 = vector.load %arg4[%c0_29, %c0_30] : memref<16x32xf32, #tpu.memory_space<vmem>>, vector<16x32xf32>
    %c3 = arith.constant 3 : index
    %c0_31 = arith.constant 0 : index
    %c0_32 = arith.constant 0 : index
    %28 = vector.load %arg5[%c3, %c0_31, %c0_32] : memref<4x32x32xf32, #tpu.memory_space<vmem>>, vector<1x32x32xf32>
    %29 = vector.shape_cast %28 : vector<1x32x32xf32> to vector<32x32xf32>
    %cst_33 = arith.constant dense<0.000000e+00> : vector<16x32xf32>
    %30 = tpu.matmul %27, %29, %cst_33 {dimension_numbers = #tpu.dot_dimension_numbers<[1], [0], [0], [1], [0, 0, 1, 1], [], []>} : vector<16x32xf32>, vector<32x32xf32>, vector<16x32xf32> -> vector<16x32xf32>
    %c3_34 = arith.constant 3 : index
    %c0_35 = arith.constant 0 : index
    %c0_36 = arith.constant 0 : index
    %31 = vector.load %arg6[%c3_34, %c0_35, %c0_36] : memref<4x1x32xf32, #tpu.memory_space<vmem>>, vector<1x1x32xf32>
    %32 = vector.shape_cast %31 : vector<1x1x32xf32> to vector<1x32xf32>
    %33 = vector.broadcast %32 : vector<1x32xf32> to vector<16x32xf32>
    %34 = arith.addf %30, %33 : vector<16x32xf32>
    %c0_37 = arith.constant 0 : index
    %c0_38 = arith.constant 0 : index
    %35 = vector.load %arg10[%c0_37, %c0_38] : memref<16x32xf32, #tpu.memory_space<vmem>>, vector<16x32xf32>
    tpu.vector_store %arg10[%c0_37, %c0_38], %34 {strides = array<i32>} : memref<16x32xf32, #tpu.memory_space<vmem>>, vector<16x32xf32>,
    return
  }
  func.func @transform_0(%arg0: i32) -> (i32, i32) {
    %c0_i32 = arith.constant 0 : i32
    %c0_i32_0 = arith.constant 0 : i32
    return %arg0, %c0_i32 : i32, i32
  }
  func.func @transform_1(%arg0: i32) -> (i32, i32) {
    %c0_i32 = arith.constant 0 : i32
    %c0_i32_0 = arith.constant 0 : i32
    return %arg0, %c0_i32 : i32, i32
  }
  func.func @transform_2(%arg0: i32) -> (i32, i32) {
    %c0_i32 = arith.constant 0 : i32
    %c0_i32_0 = arith.constant 0 : i32
    return %arg0, %c0_i32 : i32, i32
  }
  func.func @transform_3(%arg0: i32) -> (i32, i32) {
    %c0_i32 = arith.constant 0 : i32
    %c0_i32_0 = arith.constant 0 : i32
    return %arg0, %c0_i32 : i32, i32
  }
  func.func @transform_4(%arg0: i32) -> (i32, i32, i32) {
    %c0_i32 = arith.constant 0 : i32
    %c0_i32_0 = arith.constant 0 : i32
    %c0_i32_1 = arith.constant 0 : i32
    %c0_i32_2 = arith.constant 0 : i32
    return %c0_i32, %c0_i32_0, %c0_i32_1 : i32, i32, i32
  }
  func.func @transform_5(%arg0: i32) -> (i32, i32, i32) {
    %c0_i32 = arith.constant 0 : i32
    %c0_i32_0 = arith.constant 0 : i32
    %c0_i32_1 = arith.constant 0 : i32
    %c0_i32_2 = arith.constant 0 : i32
    return %c0_i32, %c0_i32_0, %c0_i32_1 : i32, i32, i32
  }
  func.func @transform_6(%arg0: i32) -> (i32, i32) {
    %c0_i32 = arith.constant 0 : i32
    %c0_i32_0 = arith.constant 0 : i32
    return %arg0, %c0_i32 : i32, i32
  }
  func.func @transform_7(%arg0: i32) -> (i32, i32) {
    %c0_i32 = arith.constant 0 : i32
    %c0_i32_0 = arith.constant 0 : i32
    return %arg0, %c0_i32 : i32, i32
  }
  func.func @transform_8(%arg0: i32) -> (i32, i32) {
    %c0_i32 = arith.constant 0 : i32
    %c0_i32_0 = arith.constant 0 : i32
    return %arg0, %c0_i32 : i32, i32
  }
  func.func @transform_9(%arg0: i32) -> (i32, i32) {
    %c0_i32 = arith.constant 0 : i32
    %c0_i32_0 = arith.constant 0 : i32
    return %arg0, %c0_i32 : i32, i32
  }
}

</mosaic_0001>

<llo_original>
// kernel: tpu_custom_call.1
$region0: #{tpu_custom_call.1}
  #allocation0 [shape = 'u32[]', space=smem, size = 0x4, offset = 0x4, fixed_abs, tag = 'smem constant byte address 0x4 - core index']
  #allocation1 [shape = 'u32[144,128]{1,0:T(1,128)}', space=vmem, size = 0x12000, scoped, tag = 'internal scratch']
  %s0 = inlined_call_operand.hbm [shape: f32[16,32], index: 0, kind: input, shape index: {}]
  %s1 = inlined_call_operand.hbm [shape: f32[16,32], index: 1, kind: input, shape index: {}]
  %s2 = inlined_call_operand.hbm [shape: f32[16,32], index: 2, kind: input, shape index: {}]
  %s3 = inlined_call_operand.hbm [shape: f32[16,32], index: 3, kind: input, shape index: {}]
  %s4 = inlined_call_operand.hbm [shape: f32[4,32,32], index: 4, kind: input, shape index: {}]
  %s5 = inlined_call_operand.vmem [shape: f32[4,1,32], index: 5, kind: input, shape index: {}]
  %s6 = inlined_call_operand.hbm [shape: f32[16,32], index: 6, kind: output, shape index: {0}]
  %s7 = inlined_call_operand.hbm [shape: f32[16,32], index: 7, kind: output, shape index: {1}]
  %s8 = inlined_call_operand.hbm [shape: f32[16,32], index: 8, kind: output, shape index: {2}]
  %s9 = inlined_call_operand.hbm [shape: f32[16,32], index: 9, kind: output, shape index: {3}]
  %10 = xla_tuple %s6, %s7, %s8, %s9
  %s11 = sld [smem:[#allocation0]]
  $region78: #{tpu_custom_call.1} parent=0
    _
  %s13 = ssub.s32 1, %s11
  %s14 = scalar_select 0, %s13, %s11
  $region1: #{tpu_custom_call.1} parent=0
    #allocation2 [shape = 'u8[8192]{0}', space=vmem, size = 0x2000, scoped, tag = 'input window, operand 0, single buffered']
    #allocation3 [shape = 's32[1]{0}', space=sflag, size = 0x4, scoped, tag = 'scoped memory for tpu_custom_call.1']
    #allocation4 [shape = 's32[1]{0}', space=sflag, size = 0x4, scoped, tag = 'scoped memory for tpu_custom_call.1']
    #allocation5 [shape = 'u8[8192]{0}', space=vmem, size = 0x2000, scoped, tag = 'input window, operand 1, single buffered']
    #allocation6 [shape = 's32[1]{0}', space=sflag, size = 0x4, scoped, tag = 'scoped memory for tpu_custom_call.1']
    #allocation7 [shape = 'u8[8192]{0}', space=vmem, size = 0x2000, scoped, tag = 'input window, operand 2, single buffered']
    #allocation8 [shape = 'u8[8192]{0}', space=vmem, size = 0x2000, scoped, tag = 'input window, operand 3, single buffered']
    #allocation9 [shape = 's32[1]{0}', space=sflag, size = 0x4, scoped, tag = 'scoped memory for tpu_custom_call.1']
    #allocation10 [shape = 'u8[65536]{0}', space=vmem, size = 0x10000, scoped, tag = 'input window, operand 4, single buffered']
    #allocation11 [shape = 'u8[8192]{0}', space=vmem, size = 0x2000, scoped, tag = 'output window, operand 0, single buffered']
    #allocation12 [shape = 'u8[8192]{0}', space=vmem, size = 0x2000, scoped, tag = 'output window, operand 1, single buffered']
    #allocation13 [shape = 's32[1]{0}', space=sflag, size = 0x4, scoped, tag = 'scoped memory for tpu_custom_call.1']
    #allocation14 [shape = 'u8[8192]{0}', space=vmem, size = 0x2000, scoped, tag = 'output window, operand 2, single buffered']
    #allocation15 [shape = 'u8[8192]{0}', space=vmem, size = 0x2000, scoped, tag = 'output window, operand 3, single buffered']
    #allocation16 [shape = 's32[1]{0}', space=sflag, size = 0x4, scoped, tag = 'scoped memory for tpu_custom_call.1']
    %15 = vsyncpa [#allocation3], 0
    %16 = vsyncpa [#allocation6], 0
    %17 = vsyncpa [#allocation9], 0
    %18 = vsyncpa [#allocation4], 0
    %19 = vsyncpa [#allocation13], 0
    %20 = vsyncpa [#allocation16], 0
    // Predicated region
    $region2: #{tpu_custom_call.1} parent=1 // pred_check
      _
    $region3: #{tpu_custom_call.1} parent=1 // pred_check_branch
      %22 = sbr.rel (0) target = $region5
    $region4: #{tpu_custom_call.1} parent=1 // pred_region
      %s24 = ssub.s32 256, 256
      %25 = vsyncadd [#allocation3], %s24
      %s26 = sshll.u32 [#allocation2], 4
      %s27 = int_to_ptr.vmem [resolvable:$true] %s26
      %32 = dma.hbm_to_vmem [thread:$0]  %s0, 256, %s27, [#allocation3], 128, 128, 8
    $region5: #{tpu_custom_call.1} parent=1 // pred_fallthru
      _
    // Predicated region
    $region6: #{tpu_custom_call.1} parent=1 // pred_check
      _
    $region7: #{tpu_custom_call.1} parent=1 // pred_check_branch
      %34 = sbr.rel (0) target = $region9
    $region8: #{tpu_custom_call.1} parent=1 // pred_region
      %s36 = ssub.s32 256, 256
      %37 = vsyncadd [#allocation6], %s36
      %s38 = sshll.u32 [#allocation5], 4
      %s39 = int_to_ptr.vmem [resolvable:$true] %s38
      %44 = dma.hbm_to_vmem [thread:$0]  %s1, 256, %s39, [#allocation6], 128, 128, 8
    $region9: #{tpu_custom_call.1} parent=1 // pred_fallthru
      _
    // Predicated region
    $region10: #{tpu_custom_call.1} parent=1 // pred_check
      _
    $region11: #{tpu_custom_call.1} parent=1 // pred_check_branch
      %46 = sbr.rel (0) target = $region13
    $region12: #{tpu_custom_call.1} parent=1 // pred_region
      %s48 = ssub.s32 256, 256
      %49 = vsyncadd [#allocation6], %s48
      %s50 = sshll.u32 [#allocation7], 4
      %s51 = int_to_ptr.vmem [resolvable:$true] %s50
      %56 = dma.hbm_to_vmem [thread:$0]  %s2, 256, %s51, [#allocation6], 128, 128, 8
    $region13: #{tpu_custom_call.1} parent=1 // pred_fallthru
      _
    // Predicated region
    $region14: #{tpu_custom_call.1} parent=1 // pred_check
      _
    $region15: #{tpu_custom_call.1} parent=1 // pred_check_branch
      %58 = sbr.rel (0) target = $region17
    $region16: #{tpu_custom_call.1} parent=1 // pred_region
      %s60 = ssub.s32 256, 256
      %61 = vsyncadd [#allocation9], %s60
      %s62 = sshll.u32 [#allocation8], 4
      %s63 = int_to_ptr.vmem [resolvable:$true] %s62
      %68 = dma.hbm_to_vmem [thread:$0]  %s3, 256, %s63, [#allocation9], 128, 128, 8
    $region17: #{tpu_custom_call.1} parent=1 // pred_fallthru
      _
    // Predicated region
    $region18: #{tpu_custom_call.1} parent=1 // pred_check
      _
    $region19: #{tpu_custom_call.1} parent=1 // pred_check_branch
      %70 = sbr.rel (0) target = $region21
    $region20: #{tpu_custom_call.1} parent=1 // pred_region
      %s72 = ssub.s32 2048, 2048
      %73 = vsyncadd [#allocation9], %s72
      %s74 = sshll.u32 [#allocation10], 4
      %s75 = int_to_ptr.vmem [resolvable:$true] %s74
      %80 = dma.hbm_to_vmem [thread:$0]  %s4, 2048, %s75, [#allocation9], 128, 128, 8
    $region21: #{tpu_custom_call.1} parent=1 // pred_fallthru
      _
    // Predicated region
    $region22: #{tpu_custom_call.1} parent=1 // pred_check
      _
    $region23: #{tpu_custom_call.1} parent=1 // pred_check_branch
      %82 = sbr.rel (0) target = $region25
    $region24: #{tpu_custom_call.1} parent=1 // pred_region
      _
    $region25: #{tpu_custom_call.1} parent=1 // pred_fallthru
      _
    // Predicated region
    $region26: #{tpu_custom_call.1} parent=1 // pred_check
      _
    $region27: #{tpu_custom_call.1} parent=1 // pred_check_branch
      %84 = sbr.rel (0) target = $region29
    $region28: #{tpu_custom_call.1} parent=1 // pred_region
      %85 = dma.done [#allocation3], 256
    $region29: #{tpu_custom_call.1} parent=1 // pred_fallthru
      _
    // Predicated region
    $region30: #{tpu_custom_call.1} parent=1 // pred_check
      _
    $region31: #{tpu_custom_call.1} parent=1 // pred_check_branch
      %87 = sbr.rel (0) target = $region33
    $region32: #{tpu_custom_call.1} parent=1 // pred_region
      %88 = dma.done [#allocation6], 256
    $region33: #{tpu_custom_call.1} parent=1 // pred_fallthru
      _
    // Predicated region
    $region34: #{tpu_custom_call.1} parent=1 // pred_check
      _
    $region35: #{tpu_custom_call.1} parent=1 // pred_check_branch
      %90 = sbr.rel (0) target = $region37
    $region36: #{tpu_custom_call.1} parent=1 // pred_region
      %91 = dma.done [#allocation6], 256
    $region37: #{tpu_custom_call.1} parent=1 // pred_fallthru
      _
    // Predicated region
    $region38: #{tpu_custom_call.1} parent=1 // pred_check
      _
    $region39: #{tpu_custom_call.1} parent=1 // pred_check_branch
      %93 = sbr.rel (0) target = $region41
    $region40: #{tpu_custom_call.1} parent=1 // pred_region
      %94 = dma.done [#allocation9], 256
    $region41: #{tpu_custom_call.1} parent=1 // pred_fallthru
      _
    // Predicated region
    $region42: #{tpu_custom_call.1} parent=1 // pred_check
      _
    $region43: #{tpu_custom_call.1} parent=1 // pred_check_branch
      %96 = sbr.rel (0) target = $region45
    $region44: #{tpu_custom_call.1} parent=1 // pred_region
      %97 = dma.done [#allocation9], 2048
    $region45: #{tpu_custom_call.1} parent=1 // pred_fallthru
      _
    %v98 = vld [vmem:[#allocation2] sm:$0xff]
    %v99 = vld [vmem:[#allocation2 + $0x8] sm:$0xff]
    %v100 = vld [vmem:[#allocation10] sm:$0xff]
    %v101 = vld [vmem:[#allocation10 + $0x8] sm:$0xff]
    %v102 = vld [vmem:[#allocation10 + $0x10] sm:$0xff]
    %v103 = vld [vmem:[#allocation10 + $0x18] sm:$0xff]
    %v104 = vld [vmem:[%s5] sm:$0x1]
    %v106 = vlaneseq
    %v107 = vshrl.u32 %v106, 7
    %v108 = vsub.s32 0, %v107
    %v109 = vrot.slane %v104, %v108
    %vm111 = vcmask 261120
    %v113 = vsel %vm111, %v98, 0
    %v116 = vsel %vm111, %v99, 0
    %118 = vmatprep.subr.mxu0 0.0
    %119 = vmatpush1.msra.mxu0 0.0
    %120 = vmatprep.subr.mxu0 0.0
    %121 = vmatpush1.msra.mxu0 0.0
    %122 = vmatprep.subr.mxu0 0.0
    %123 = vmatpush1.msra.mxu0 0.0
    %124 = vmatprep.subr.mxu0 0.0
    %125 = vmatpush1.msra.mxu0 0.0
    %126 = vmatprep.subr.mxu0 0.0
    %127 = vmatpush1.msra.mxu0 0.0
    %128 = vmatprep.subr.mxu0 0.0
    %129 = vmatpush1.msra.mxu0 0.0
    %130 = vmatprep.subr.mxu0 0.0
    %131 = vmatpush1.msra.mxu0 0.0
    %132 = vmatprep.subr.mxu0 0.0
    %133 = vmatpush1.msra.mxu0 0.0
    %134 = vmatprep.subr.mxu0 0.0
    %135 = vmatpush1.msra.mxu0 0.0
    %136 = vmatprep.subr.mxu0 0.0
    %137 = vmatpush1.msra.mxu0 0.0
    %138 = vmatprep.subr.mxu0 0.0
    %139 = vmatpush1.msra.mxu0 0.0
    %140 = vmatprep.subr.mxu0 0.0
    %141 = vmatpush1.msra.mxu0 0.0
    %142 = vmatprep.subr.mxu0 0.0
    %143 = vmatpush1.msra.mxu0 %v103
    %144 = vmatprep.subr.mxu0 0.0
    %145 = vmatpush1.msra.mxu0 %v102
    %146 = vmatprep.subr.mxu0 0.0
    %147 = vmatpush1.msra.mxu0 %v101
    %148 = vmatprep.subr.mxu0 0.0
    %149 = vmatpush1.msra.mxu0 %v100
    %150 = vmatprep.subr.mxu0 0.0
    %151 = vmatpush2.msra.mxu0 0.0
    %152 = vmatprep.subr.mxu0 0.0
    %153 = vmatpush2.msra.mxu0 0.0
    %154 = vmatprep.subr.mxu0 0.0
    %155 = vmatpush2.msra.mxu0 0.0
    %156 = vmatprep.subr.mxu0 0.0
    %157 = vmatpush2.msra.mxu0 0.0
    %158 = vmatprep.subr.mxu0 0.0
    %159 = vmatpush2.msra.mxu0 0.0
    %160 = vmatprep.subr.mxu0 0.0
    %161 = vmatpush2.msra.mxu0 0.0
    %162 = vmatprep.subr.mxu0 0.0
    %163 = vmatpush2.msra.mxu0 0.0
    %164 = vmatprep.subr.mxu0 0.0
    %165 = vmatpush2.msra.mxu0 0.0
    %166 = vmatprep.subr.mxu0 0.0
    %167 = vmatpush2.msra.mxu0 0.0
    %168 = vmatprep.subr.mxu0 0.0
    %169 = vmatpush2.msra.mxu0 0.0
    %170 = vmatprep.subr.mxu0 0.0
    %171 = vmatpush2.msra.mxu0 0.0
    %172 = vmatprep.subr.mxu0 0.0
    %173 = vmatpush2.msra.mxu0 0.0
    %174 = vmatprep.subr.mxu0 0.0
    %175 = vmatpush2.msra.mxu0 0.0
    %176 = vmatprep.subr.mxu0 0.0
    %177 = vmatpush2.msra.mxu0 0.0
    %178 = vmatprep.subr.mxu0 0.0
    %179 = vmatpush2.msra.mxu0 0.0
    %180 = vmatprep.subr.mxu0 0.0
    %181 = vmatpush2.msra.mxu0 0.0
    %182 = vmatprep.mubr.f32.mxu0 0.0
    %183 = vmatmul.mubr.f32.gmra.mxu0 %v113
    %v184 = vpop.f32.mrf.mxu0
    %v185 = vadd.f32 %v109, %v184
    %v186 = vpop.f32.mrf.mxu0
    %187 = vmatprep.mubr.f32.mxu0 0.0
    %188 = vmatmul.mubr.f32.gmra.mxu0 %v116
    %v189 = vpop.f32.mrf.mxu0
    %v190 = vadd.f32 %v109, %v189
    %v191 = vpop.f32.mrf.mxu0
    %192 = vdwg.mxu0
    %193 = vst.msk [vmem:[#allocation11] sm:$0xff] %vm111, %v185
    %194 = vst.msk [vmem:[#allocation11 + $0x8] sm:$0xff] %vm111, %v190
    %v195 = vld [vmem:[#allocation5] sm:$0xff]
    %v196 = vld [vmem:[#allocation5 + $0x8] sm:$0xff]
    %s197 = scalar_lea.vmem [#allocation10], 32
    %v198 = vld [vmem:[%s197] sm:$0xff]
    %v199 = vld [vmem:[%s197 + $0x8] sm:$0xff]
    %v200 = vld [vmem:[%s197 + $0x10] sm:$0xff]
    %v201 = vld [vmem:[%s197 + $0x18] sm:$0xff]
    %s202 = scalar_lea.vmem %s5, 1
    %v203 = vld [vmem:[%s202] sm:$0x1]
    %v205 = vlaneseq
    %v206 = vshrl.u32 %v205, 7
    %v207 = vsub.s32 0, %v206
    %v208 = vrot.slane %v203, %v207
    %v211 = vsel %vm111, %v195, 0
    %v214 = vsel %vm111, %v196, 0
    %216 = vmatprep.subr.mxu0 0.0
    %217 = vmatpush1.msra.mxu0 0.0
    %218 = vmatprep.subr.mxu0 0.0
    %219 = vmatpush1.msra.mxu0 0.0
    %220 = vmatprep.subr.mxu0 0.0
    %221 = vmatpush1.msra.mxu0 0.0
    %222 = vmatprep.subr.mxu0 0.0
    %223 = vmatpush1.msra.mxu0 0.0
    %224 = vmatprep.subr.mxu0 0.0
    %225 = vmatpush1.msra.mxu0 0.0
    %226 = vmatprep.subr.mxu0 0.0
    %227 = vmatpush1.msra.mxu0 0.0
    %228 = vmatprep.subr.mxu0 0.0
    %229 = vmatpush1.msra.mxu0 0.0
    %230 = vmatprep.subr.mxu0 0.0
    %231 = vmatpush1.msra.mxu0 0.0
    %232 = vmatprep.subr.mxu0 0.0
    %233 = vmatpush1.msra.mxu0 0.0
    %234 = vmatprep.subr.mxu0 0.0
    %235 = vmatpush1.msra.mxu0 0.0
    %236 = vmatprep.subr.mxu0 0.0
    %237 = vmatpush1.msra.mxu0 0.0
    %238 = vmatprep.subr.mxu0 0.0
    %239 = vmatpush1.msra.mxu0 0.0
    %240 = vmatprep.subr.mxu0 0.0
    %241 = vmatpush1.msra.mxu0 %v201
    %242 = vmatprep.subr.mxu0 0.0
    %243 = vmatpush1.msra.mxu0 %v200
    %244 = vmatprep.subr.mxu0 0.0
    %245 = vmatpush1.msra.mxu0 %v199
    %246 = vmatprep.subr.mxu0 0.0
    %247 = vmatpush1.msra.mxu0 %v198
    %248 = vmatprep.subr.mxu0 0.0
    %249 = vmatpush2.msra.mxu0 0.0
    %250 = vmatprep.subr.mxu0 0.0
    %251 = vmatpush2.msra.mxu0 0.0
    %252 = vmatprep.subr.mxu0 0.0
    %253 = vmatpush2.msra.mxu0 0.0
    %254 = vmatprep.subr.mxu0 0.0
    %255 = vmatpush2.msra.mxu0 0.0
    %256 = vmatprep.subr.mxu0 0.0
    %257 = vmatpush2.msra.mxu0 0.0
    %258 = vmatprep.subr.mxu0 0.0
    %259 = vmatpush2.msra.mxu0 0.0
    %260 = vmatprep.subr.mxu0 0.0
    %261 = vmatpush2.msra.mxu0 0.0
    %262 = vmatprep.subr.mxu0 0.0
    %263 = vmatpush2.msra.mxu0 0.0
    %264 = vmatprep.subr.mxu0 0.0
    %265 = vmatpush2.msra.mxu0 0.0
    %266 = vmatprep.subr.mxu0 0.0
    %267 = vmatpush2.msra.mxu0 0.0
    %268 = vmatprep.subr.mxu0 0.0
    %269 = vmatpush2.msra.mxu0 0.0
    %270 = vmatprep.subr.mxu0 0.0
    %271 = vmatpush2.msra.mxu0 0.0
    %272 = vmatprep.subr.mxu0 0.0
    %273 = vmatpush2.msra.mxu0 0.0
    %274 = vmatprep.subr.mxu0 0.0
    %275 = vmatpush2.msra.mxu0 0.0
    %276 = vmatprep.subr.mxu0 0.0
    %277 = vmatpush2.msra.mxu0 0.0
    %278 = vmatprep.subr.mxu0 0.0
    %279 = vmatpush2.msra.mxu0 0.0
    %280 = vmatprep.mubr.f32.mxu0 0.0
    %281 = vmatmul.mubr.f32.gmra.mxu0 %v211
    %v282 = vpop.f32.mrf.mxu0
    %v283 = vadd.f32 %v208, %v282
    %v284 = vpop.f32.mrf.mxu0
    %285 = vmatprep.mubr.f32.mxu0 0.0
    %286 = vmatmul.mubr.f32.gmra.mxu0 %v214
    %v287 = vpop.f32.mrf.mxu0
    %v288 = vadd.f32 %v208, %v287
    %v289 = vpop.f32.mrf.mxu0
    %290 = vdwg.mxu0
    %291 = vst.msk [vmem:[#allocation12] sm:$0xff] %vm111, %v283
    %292 = vst.msk [vmem:[#allocation12 + $0x8] sm:$0xff] %vm111, %v288
    %v293 = vld [vmem:[#allocation7] sm:$0xff]
    %v294 = vld [vmem:[#allocation7 + $0x8] sm:$0xff]
    %s295 = scalar_lea.vmem [#allocation10], 64
    %v296 = vld [vmem:[%s295] sm:$0xff]
    %v297 = vld [vmem:[%s295 + $0x8] sm:$0xff]
    %v298 = vld [vmem:[%s295 + $0x10] sm:$0xff]
    %v299 = vld [vmem:[%s295 + $0x18] sm:$0xff]
    %s300 = scalar_lea.vmem %s5, 2
    %v301 = vld [vmem:[%s300] sm:$0x1]
    %v303 = vlaneseq
    %v304 = vshrl.u32 %v303, 7
    %v305 = vsub.s32 0, %v304
    %v306 = vrot.slane %v301, %v305
    %v309 = vsel %vm111, %v293, 0
    %v312 = vsel %vm111, %v294, 0
    %314 = vmatprep.subr.mxu0 0.0
    %315 = vmatpush1.msra.mxu0 0.0
    %316 = vmatprep.subr.mxu0 0.0
    %317 = vmatpush1.msra.mxu0 0.0
    %318 = vmatprep.subr.mxu0 0.0
    %319 = vmatpush1.msra.mxu0 0.0
    %320 = vmatprep.subr.mxu0 0.0
    %321 = vmatpush1.msra.mxu0 0.0
    %322 = vmatprep.subr.mxu0 0.0
    %323 = vmatpush1.msra.mxu0 0.0
    %324 = vmatprep.subr.mxu0 0.0
    %325 = vmatpush1.msra.mxu0 0.0
    %326 = vmatprep.subr.mxu0 0.0
    %327 = vmatpush1.msra.mxu0 0.0
    %328 = vmatprep.subr.mxu0 0.0
    %329 = vmatpush1.msra.mxu0 0.0
    %330 = vmatprep.subr.mxu0 0.0
    %331 = vmatpush1.msra.mxu0 0.0
    %332 = vmatprep.subr.mxu0 0.0
    %333 = vmatpush1.msra.mxu0 0.0
    %334 = vmatprep.subr.mxu0 0.0
    %335 = vmatpush1.msra.mxu0 0.0
    %336 = vmatprep.subr.mxu0 0.0
    %337 = vmatpush1.msra.mxu0 0.0
    %338 = vmatprep.subr.mxu0 0.0
    %339 = vmatpush1.msra.mxu0 %v299
    %340 = vmatprep.subr.mxu0 0.0
    %341 = vmatpush1.msra.mxu0 %v298
    %342 = vmatprep.subr.mxu0 0.0
    %343 = vmatpush1.msra.mxu0 %v297
    %344 = vmatprep.subr.mxu0 0.0
    %345 = vmatpush1.msra.mxu0 %v296
    %346 = vmatprep.subr.mxu0 0.0
    %347 = vmatpush2.msra.mxu0 0.0
    %348 = vmatprep.subr.mxu0 0.0
    %349 = vmatpush2.msra.mxu0 0.0
    %350 = vmatprep.subr.mxu0 0.0
    %351 = vmatpush2.msra.mxu0 0.0
    %352 = vmatprep.subr.mxu0 0.0
    %353 = vmatpush2.msra.mxu0 0.0
    %354 = vmatprep.subr.mxu0 0.0
    %355 = vmatpush2.msra.mxu0 0.0
    %356 = vmatprep.subr.mxu0 0.0
    %357 = vmatpush2.msra.mxu0 0.0
    %358 = vmatprep.subr.mxu0 0.0
    %359 = vmatpush2.msra.mxu0 0.0
    %360 = vmatprep.subr.mxu0 0.0
    %361 = vmatpush2.msra.mxu0 0.0
    %362 = vmatprep.subr.mxu0 0.0
    %363 = vmatpush2.msra.mxu0 0.0
    %364 = vmatprep.subr.mxu0 0.0
    %365 = vmatpush2.msra.mxu0 0.0
    %366 = vmatprep.subr.mxu0 0.0
    %367 = vmatpush2.msra.mxu0 0.0
    %368 = vmatprep.subr.mxu0 0.0
    %369 = vmatpush2.msra.mxu0 0.0
    %370 = vmatprep.subr.mxu0 0.0
    %371 = vmatpush2.msra.mxu0 0.0
    %372 = vmatprep.subr.mxu0 0.0
    %373 = vmatpush2.msra.mxu0 0.0
    %374 = vmatprep.subr.mxu0 0.0
    %375 = vmatpush2.msra.mxu0 0.0
    %376 = vmatprep.subr.mxu0 0.0
    %377 = vmatpush2.msra.mxu0 0.0
    %378 = vmatprep.mubr.f32.mxu0 0.0
    %379 = vmatmul.mubr.f32.gmra.mxu0 %v309
    %v380 = vpop.f32.mrf.mxu0
    %v381 = vadd.f32 %v306, %v380
    %v382 = vpop.f32.mrf.mxu0
    %383 = vmatprep.mubr.f32.mxu0 0.0
    %384 = vmatmul.mubr.f32.gmra.mxu0 %v312
    %v385 = vpop.f32.mrf.mxu0
    %v386 = vadd.f32 %v306, %v385
    %v387 = vpop.f32.mrf.mxu0
    %388 = vdwg.mxu0
    %389 = vst.msk [vmem:[#allocation14] sm:$0xff] %vm111, %v381
    %390 = vst.msk [vmem:[#allocation14 + $0x8] sm:$0xff] %vm111, %v386
    %v391 = vld [vmem:[#allocation8] sm:$0xff]
    %v392 = vld [vmem:[#allocation8 + $0x8] sm:$0xff]
    %s393 = scalar_lea.vmem [#allocation10], 96
    %v394 = vld [vmem:[%s393] sm:$0xff]
    %v395 = vld [vmem:[%s393 + $0x8] sm:$0xff]
    %v396 = vld [vmem:[%s393 + $0x10] sm:$0xff]
    %v397 = vld [vmem:[%s393 + $0x18] sm:$0xff]
    %s398 = scalar_lea.vmem %s5, 3
    %v399 = vld [vmem:[%s398] sm:$0x1]
    %v401 = vlaneseq
    %v402 = vshrl.u32 %v401, 7
    %v403 = vsub.s32 0, %v402
    %v404 = vrot.slane %v399, %v403
    %v407 = vsel %vm111, %v391, 0
    %v410 = vsel %vm111, %v392, 0
    %412 = vmatprep.subr.mxu0 0.0
    %413 = vmatpush1.msra.mxu0 0.0
    %414 = vmatprep.subr.mxu0 0.0
    %415 = vmatpush1.msra.mxu0 0.0
    %416 = vmatprep.subr.mxu0 0.0
    %417 = vmatpush1.msra.mxu0 0.0
    %418 = vmatprep.subr.mxu0 0.0
    %419 = vmatpush1.msra.mxu0 0.0
    %420 = vmatprep.subr.mxu0 0.0
    %421 = vmatpush1.msra.mxu0 0.0
    %422 = vmatprep.subr.mxu0 0.0
    %423 = vmatpush1.msra.mxu0 0.0
    %424 = vmatprep.subr.mxu0 0.0
    %425 = vmatpush1.msra.mxu0 0.0
    %426 = vmatprep.subr.mxu0 0.0
    %427 = vmatpush1.msra.mxu0 0.0
    %428 = vmatprep.subr.mxu0 0.0
    %429 = vmatpush1.msra.mxu0 0.0
    %430 = vmatprep.subr.mxu0 0.0
    %431 = vmatpush1.msra.mxu0 0.0
    %432 = vmatprep.subr.mxu0 0.0
    %433 = vmatpush1.msra.mxu0 0.0
    %434 = vmatprep.subr.mxu0 0.0
    %435 = vmatpush1.msra.mxu0 0.0
    %436 = vmatprep.subr.mxu0 0.0
    %437 = vmatpush1.msra.mxu0 %v397
    %438 = vmatprep.subr.mxu0 0.0
    %439 = vmatpush1.msra.mxu0 %v396
    %440 = vmatprep.subr.mxu0 0.0
    %441 = vmatpush1.msra.mxu0 %v395
    %442 = vmatprep.subr.mxu0 0.0
    %443 = vmatpush1.msra.mxu0 %v394
    %444 = vmatprep.subr.mxu0 0.0
    %445 = vmatpush2.msra.mxu0 0.0
    %446 = vmatprep.subr.mxu0 0.0
    %447 = vmatpush2.msra.mxu0 0.0
    %448 = vmatprep.subr.mxu0 0.0
    %449 = vmatpush2.msra.mxu0 0.0
    %450 = vmatprep.subr.mxu0 0.0
    %451 = vmatpush2.msra.mxu0 0.0
    %452 = vmatprep.subr.mxu0 0.0
    %453 = vmatpush2.msra.mxu0 0.0
    %454 = vmatprep.subr.mxu0 0.0
    %455 = vmatpush2.msra.mxu0 0.0
    %456 = vmatprep.subr.mxu0 0.0
    %457 = vmatpush2.msra.mxu0 0.0
    %458 = vmatprep.subr.mxu0 0.0
    %459 = vmatpush2.msra.mxu0 0.0
    %460 = vmatprep.subr.mxu0 0.0
    %461 = vmatpush2.msra.mxu0 0.0
    %462 = vmatprep.subr.mxu0 0.0
    %463 = vmatpush2.msra.mxu0 0.0
    %464 = vmatprep.subr.mxu0 0.0
    %465 = vmatpush2.msra.mxu0 0.0
    %466 = vmatprep.subr.mxu0 0.0
    %467 = vmatpush2.msra.mxu0 0.0
    %468 = vmatprep.subr.mxu0 0.0
    %469 = vmatpush2.msra.mxu0 0.0
    %470 = vmatprep.subr.mxu0 0.0
    %471 = vmatpush2.msra.mxu0 0.0
    %472 = vmatprep.subr.mxu0 0.0
    %473 = vmatpush2.msra.mxu0 0.0
    %474 = vmatprep.subr.mxu0 0.0
    %475 = vmatpush2.msra.mxu0 0.0
    %476 = vmatprep.mubr.f32.mxu0 0.0
    %477 = vmatmul.mubr.f32.gmra.mxu0 %v407
    %v478 = vpop.f32.mrf.mxu0
    %v479 = vadd.f32 %v404, %v478
    %v480 = vpop.f32.mrf.mxu0
    %481 = vmatprep.mubr.f32.mxu0 0.0
    %482 = vmatmul.mubr.f32.gmra.mxu0 %v410
    %v483 = vpop.f32.mrf.mxu0
    %v484 = vadd.f32 %v404, %v483
    %v485 = vpop.f32.mrf.mxu0
    %486 = vdwg.mxu0
    %487 = vst.msk [vmem:[#allocation15] sm:$0xff] %vm111, %v479
    %488 = vst.msk [vmem:[#allocation15 + $0x8] sm:$0xff] %vm111, %v484
    // Predicated region
    $region46: #{tpu_custom_call.1} parent=1 // pred_check
      _
    $region47: #{tpu_custom_call.1} parent=1 // pred_check_branch
      %490 = sbr.rel (0) target = $region49
    $region48: #{tpu_custom_call.1} parent=1 // pred_region
      %s492 = ssub.s32 256, 256
      %493 = vsyncadd [#allocation4], %s492
      %s494 = sshll.u32 [#allocation11], 4
      %s495 = int_to_ptr.vmem [resolvable:$true] %s494
      %500 = dma.vmem_to_hbm [thread:$0]  %s495, 256, %s6, [#allocation4], 128, 128, 8
    $region49: #{tpu_custom_call.1} parent=1 // pred_fallthru
      _
    // Predicated region
    $region50: #{tpu_custom_call.1} parent=1 // pred_check
      _
    $region51: #{tpu_custom_call.1} parent=1 // pred_check_branch
      %502 = sbr.rel (0) target = $region53
    $region52: #{tpu_custom_call.1} parent=1 // pred_region
      %s504 = ssub.s32 256, 256
      %505 = vsyncadd [#allocation13], %s504
      %s506 = sshll.u32 [#allocation12], 4
      %s507 = int_to_ptr.vmem [resolvable:$true] %s506
      %512 = dma.vmem_to_hbm [thread:$0]  %s507, 256, %s7, [#allocation13], 128, 128, 8
    $region53: #{tpu_custom_call.1} parent=1 // pred_fallthru
      _
    // Predicated region
    $region54: #{tpu_custom_call.1} parent=1 // pred_check
      _
    $region55: #{tpu_custom_call.1} parent=1 // pred_check_branch
      %514 = sbr.rel (0) target = $region57
    $region56: #{tpu_custom_call.1} parent=1 // pred_region
      %s516 = ssub.s32 256, 256
      %517 = vsyncadd [#allocation13], %s516
      %s518 = sshll.u32 [#allocation14], 4
      %s519 = int_to_ptr.vmem [resolvable:$true] %s518
      %524 = dma.vmem_to_hbm [thread:$0]  %s519, 256, %s8, [#allocation13], 128, 128, 8
    $region57: #{tpu_custom_call.1} parent=1 // pred_fallthru
      _
    // Predicated region
    $region58: #{tpu_custom_call.1} parent=1 // pred_check
      _
    $region59: #{tpu_custom_call.1} parent=1 // pred_check_branch
      %526 = sbr.rel (0) target = $region61
    $region60: #{tpu_custom_call.1} parent=1 // pred_region
      %s528 = ssub.s32 256, 256
      %529 = vsyncadd [#allocation16], %s528
      %s530 = sshll.u32 [#allocation15], 4
      %s531 = int_to_ptr.vmem [resolvable:$true] %s530
      %536 = dma.vmem_to_hbm [thread:$0]  %s531, 256, %s9, [#allocation16], 128, 128, 8
    $region61: #{tpu_custom_call.1} parent=1 // pred_fallthru
      _
    // Predicated region
    $region62: #{tpu_custom_call.1} parent=1 // pred_check
      _
    $region63: #{tpu_custom_call.1} parent=1 // pred_check_branch
      %538 = sbr.rel (0) target = $region65
    $region64: #{tpu_custom_call.1} parent=1 // pred_region
      %539 = dma.done [#allocation4], 256
    $region65: #{tpu_custom_call.1} parent=1 // pred_fallthru
      _
    // Predicated region
    $region66: #{tpu_custom_call.1} parent=1 // pred_check
      _
    $region67: #{tpu_custom_call.1} parent=1 // pred_check_branch
      %541 = sbr.rel (0) target = $region69
    $region68: #{tpu_custom_call.1} parent=1 // pred_region
      %542 = dma.done [#allocation13], 256
    $region69: #{tpu_custom_call.1} parent=1 // pred_fallthru
      _
    // Predicated region
    $region70: #{tpu_custom_call.1} parent=1 // pred_check
      _
    $region71: #{tpu_custom_call.1} parent=1 // pred_check_branch
      %544 = sbr.rel (0) target = $region73
    $region72: #{tpu_custom_call.1} parent=1 // pred_region
      %545 = dma.done [#allocation13], 256
    $region73: #{tpu_custom_call.1} parent=1 // pred_fallthru
      _
    // Predicated region
    $region74: #{tpu_custom_call.1} parent=1 // pred_check
      _
    $region75: #{tpu_custom_call.1} parent=1 // pred_check_branch
      %547 = sbr.rel (0) target = $region77
    $region76: #{tpu_custom_call.1} parent=1 // pred_region
      %548 = dma.done [#allocation16], 256
    $region77: #{tpu_custom_call.1} parent=1 // pred_fallthru
      _
    %549 = vsyncpa [#allocation3], 1
    %550 = vsyncpa [#allocation6], 1
    %551 = vsyncpa [#allocation9], 1
    %552 = vsyncpa [#allocation4], 1
    %553 = vsyncpa [#allocation13], 1
    %554 = vsyncpa [#allocation16], 1

</llo_original>
